<compile_context>
chip_gen: v5e
topology: v5e:2x2
jax: 0.10.0
libtpu: 0.0.40
codegen_flags: <defaults>
</compile_context>

<pallas_src>
import jax
import jax.numpy as jnp
from jax.experimental import pallas as pl
from jax.experimental.pallas import tpu as pltpu

LANE = 128


def _round_up(n, m):
    return ((n + m - 1) // m) * m


def fnn_kernel(x_ref, w1_ref, b1_ref, w2_ref, b2_ref, w3_ref, b3_ref, o_ref):
    # Layer 1: Linear (bf16 MXU inputs, f32 accumulation) + bias + ReLU in f32.
    h1 = jnp.dot(x_ref[...], w1_ref[...], preferred_element_type=jnp.float32)
    h1 = jnp.maximum(h1 + b1_ref[...], 0.0)
    # Layer 2: Linear + ReLU.
    h2 = jnp.dot(h1.astype(jnp.bfloat16), w2_ref[...],
                 preferred_element_type=jnp.float32)
    h2 = jnp.maximum(h2 + b2_ref[...], 0.0)
    # Layer 3: Linear (no activation), lane-dense f32 store.
    out = jnp.dot(h2.astype(jnp.bfloat16), w3_ref[...],
                  preferred_element_type=jnp.float32)
    o_ref[...] = (out + b3_ref[...]).astype(o_ref.dtype)


def _weight_spec(shape, single_buffer):
    """Grid-invariant block: constant index_map; single-buffer it when supported."""
    idx = lambda i: (0, 0)
    if single_buffer and hasattr(pl, "Buffered"):
        return pl.BlockSpec(shape, idx, pipeline_mode=pl.Buffered(1))
    return pl.BlockSpec(shape, idx)


def _build_fnn_call(Bp, in_p, hid_p, out_p, tile_b, flops, bytes_accessed,
                    single_buffer_weights):
    return pl.pallas_call(
        fnn_kernel,
        out_shape=jax.ShapeDtypeStruct((Bp, out_p), jnp.float32),
        grid_spec=pltpu.PrefetchScalarGridSpec(
            num_scalar_prefetch=0,
            grid=(Bp // tile_b,),
            in_specs=[
                pl.BlockSpec((tile_b, in_p), lambda i: (i, 0)),        # x tile
                _weight_spec((in_p, hid_p), single_buffer_weights),    # w1
                _weight_spec((1, hid_p), single_buffer_weights),       # b1
                _weight_spec((hid_p, hid_p), single_buffer_weights),   # w2
                _weight_spec((1, hid_p), single_buffer_weights),       # b2
                _weight_spec((hid_p, out_p), single_buffer_weights),   # w3
                _weight_spec((1, out_p), single_buffer_weights),       # b3
            ],
            out_specs=pl.BlockSpec((tile_b, out_p), lambda i: (i, 0)),
        ),
        compiler_params=pltpu.CompilerParams(
            dimension_semantics=("parallel",),
        ),
        cost_estimate=pl.CostEstimate(
            flops=flops, transcendentals=0, bytes_accessed=bytes_accessed),
    )


def fnn_forward(x, params, *, tile_b=128):
    """x: [B, input_size] float32. params: dict of transposed weights/biases."""
    w1, b1 = params["w1"], params["b1"]  # [in, hid], [1, hid]
    w2, b2 = params["w2"], params["b2"]  # [hid, hid], [1, hid]
    w3, b3 = params["w3"], params["b3"]  # [hid, out], [1, out]

    B, in_dim = x.shape
    hid = w1.shape[1]
    out_dim = w3.shape[1]

    # Lane-dense padding: feature dims -> multiples of 128, batch -> multiple of
    # tile_b (no assert; padding rows/cols are zeros and are sliced off below).
    in_p = _round_up(in_dim, LANE)
    hid_p = _round_up(hid, LANE)
    out_p = _round_up(out_dim, LANE)
    Bp = _round_up(B, tile_b)

    def pad2(a, rows, cols):
        return jnp.pad(a, ((0, rows - a.shape[0]), (0, cols - a.shape[1])))

    # bf16 MXU operands; biases stay f32 (added after f32 accumulation).
    xp = pad2(x, Bp, in_p).astype(jnp.bfloat16)
    w1p = pad2(w1, in_p, hid_p).astype(jnp.bfloat16)
    w2p = pad2(w2, hid_p, hid_p).astype(jnp.bfloat16)
    w3p = pad2(w3, hid_p, out_p).astype(jnp.bfloat16)
    b1p = pad2(b1, 1, hid_p).astype(jnp.float32)
    b2p = pad2(b2, 1, hid_p).astype(jnp.float32)
    b3p = pad2(b3, 1, out_p).astype(jnp.float32)

    flops = 2 * Bp * (in_p * hid_p + hid_p * hid_p + hid_p * out_p)
    bytes_accessed = (
        xp.size * 2 + w1p.size * 2 + w2p.size * 2 + w3p.size * 2
        + (b1p.size + b2p.size + b3p.size) * 4 + Bp * out_p * 4
    )

    args = (xp, w1p, b1p, w2p, b2p, w3p, b3p)
    try:
        out_padded = _build_fnn_call(
            Bp, in_p, hid_p, out_p, tile_b, flops, bytes_accessed,
            single_buffer_weights=True)(*args)
    except Exception:
        # Fallback for JAX versions where pipeline_mode=pl.Buffered(1) is not
        # supported by the TPU lowering; identical math, default buffering.
        out_padded = _build_fnn_call(
            Bp, in_p, hid_p, out_p, tile_b, flops, bytes_accessed,
            single_buffer_weights=False)(*args)

    return out_padded[:B, :out_dim]


def init_params(key, input_size, hidden_size, output_size):
    """Deterministic init mimicking torch.nn.Linear (U(-1/sqrt(fan_in), 1/sqrt(fan_in))).
    Weights stored transposed ([in, out]) for x @ W."""
    keys = jax.random.split(key, 6)

    def linear(kw, kb, fan_in, fan_out):
        bound = 1.0 / jnp.sqrt(fan_in)
        w = jax.random.uniform(kw, (fan_in, fan_out), jnp.float32, -bound, bound)
        b = jax.random.uniform(kb, (1, fan_out), jnp.float32, -bound, bound)
        return w, b

    w1, b1 = linear(keys[0], keys[1], input_size, hidden_size)
    w2, b2 = linear(keys[2], keys[3], hidden_size, hidden_size)
    w3, b3 = linear(keys[4], keys[5], hidden_size, output_size)
    return {"w1": w1, "b1": b1, "w2": w2, "b2": b2, "w3": w3, "b3": b3}


def fnn_reference(x, p):
    h1 = jnp.maximum(x @ p["w1"] + p["b1"], 0.0)
    h2 = jnp.maximum(h1 @ p["w2"] + p["b2"], 0.0)
    return h2 @ p["w3"] + p["b3"]


if __name__ == "__main__":
    # Small shapes consistent with the module's forward.
    batch, input_size, hidden_size, output_size = 16, 32, 64, 8

    key = jax.random.PRNGKey(0)
    kx, kp = jax.random.split(key)
    x = jax.random.normal(kx, (batch, input_size), dtype=jnp.float32)
    params = init_params(kp, input_size, hidden_size, output_size)

    out = fnn_forward(x, params, tile_b=128)
    out = jax.block_until_ready(out)

    ref = fnn_reference(x, params)  # f32 reference; kernel uses bf16 MXU inputs
    assert out.shape == (batch, output_size)
    assert jnp.allclose(out, ref, atol=3e-2, rtol=3e-2), "mismatch vs reference"

    print("KERNEL_OK")
</pallas_src>

<mosaic_0001>
module attributes {stable_mosaic.version = 11 : i64} {
  func.func @fnn_kernel(%arg0: i32, %arg1: memref<128x128xbf16, #tpu.memory_space<vmem>>, %arg2: memref<128x128xbf16, #tpu.memory_space<vmem>>, %arg3: memref<1x128xf32, #tpu.memory_space<vmem>>, %arg4: memref<128x128xbf16, #tpu.memory_space<vmem>>, %arg5: memref<1x128xf32, #tpu.memory_space<vmem>>, %arg6: memref<128x128xbf16, #tpu.memory_space<vmem>>, %arg7: memref<1x128xf32, #tpu.memory_space<vmem>>, %arg8: memref<128x128xf32, #tpu.memory_space<vmem>>) attributes {dimension_semantics = [#tpu.dimension_semantics<parallel>], iteration_bounds = array<i64: 1>, scalar_prefetch = 0 : i64, scratch_operands = 0 : i64, tpu.core_type = #tpu.core_type<tc>, window_params = [{transform_indices = @transform_0, window_bounds = array<i64: 128, 128>}, {pipeline_mode = #tpu.pipeline_mode<synchronous>, transform_indices = @transform_1, window_bounds = array<i64: 128, 128>}, {pipeline_mode = #tpu.pipeline_mode<synchronous>, transform_indices = @transform_2, window_bounds = array<i64: 1, 128>}, {pipeline_mode = #tpu.pipeline_mode<synchronous>, transform_indices = @transform_3, window_bounds = array<i64: 128, 128>}, {pipeline_mode = #tpu.pipeline_mode<synchronous>, transform_indices = @transform_4, window_bounds = array<i64: 1, 128>}, {pipeline_mode = #tpu.pipeline_mode<synchronous>, transform_indices = @transform_5, window_bounds = array<i64: 128, 128>}, {pipeline_mode = #tpu.pipeline_mode<synchronous>, transform_indices = @transform_6, window_bounds = array<i64: 1, 128>}, {transform_indices = @transform_7, window_bounds = array<i64: 128, 128>}]} {
    %c0 = arith.constant 0 : index
    %c0_0 = arith.constant 0 : index
    %0 = vector.load %arg1[%c0, %c0_0] : memref<128x128xbf16, #tpu.memory_space<vmem>>, vector<128x128xbf16>
    %c0_1 = arith.constant 0 : index
    %c0_2 = arith.constant 0 : index
    %1 = vector.load %arg2[%c0_1, %c0_2] : memref<128x128xbf16, #tpu.memory_space<vmem>>, vector<128x128xbf16>
    %cst = arith.constant dense<0.000000e+00> : vector<128x128xf32>
    %2 = tpu.matmul %0, %1, %cst {dimension_numbers = #tpu.dot_dimension_numbers<[1], [0], [0], [1], [0, 0, 1, 1], [], []>} : vector<128x128xbf16>, vector<128x128xbf16>, vector<128x128xf32> -> vector<128x128xf32>
    %c0_3 = arith.constant 0 : index
    %c0_4 = arith.constant 0 : index
    %3 = vector.load %arg3[%c0_3, %c0_4] : memref<1x128xf32, #tpu.memory_space<vmem>>, vector<1x128xf32>
    %4 = vector.broadcast %3 : vector<1x128xf32> to vector<128x128xf32>
    %5 = arith.addf %2, %4 : vector<128x128xf32>
    %cst_5 = arith.constant 0.000000e+00 : f32
    %6 = vector.broadcast %cst_5 : f32 to vector<128x128xf32>
    %7 = arith.maximumf %5, %6 : vector<128x128xf32>
    %8 = arith.truncf %7 : vector<128x128xf32> to vector<128x128xbf16>
    %c0_6 = arith.constant 0 : index
    %c0_7 = arith.constant 0 : index
    %9 = vector.load %arg4[%c0_6, %c0_7] : memref<128x128xbf16, #tpu.memory_space<vmem>>, vector<128x128xbf16>
    %cst_8 = arith.constant dense<0.000000e+00> : vector<128x128xf32>
    %10 = tpu.matmul %8, %9, %cst_8 {dimension_numbers = #tpu.dot_dimension_numbers<[1], [0], [0], [1], [0, 0, 1, 1], [], []>} : vector<128x128xbf16>, vector<128x128xbf16>, vector<128x128xf32> -> vector<128x128xf32>
    %c0_9 = arith.constant 0 : index
    %c0_10 = arith.constant 0 : index
    %11 = vector.load %arg5[%c0_9, %c0_10] : memref<1x128xf32, #tpu.memory_space<vmem>>, vector<1x128xf32>
    %12 = vector.broadcast %11 : vector<1x128xf32> to vector<128x128xf32>
    %13 = arith.addf %10, %12 : vector<128x128xf32>
    %cst_11 = arith.constant 0.000000e+00 : f32
    %14 = vector.broadcast %cst_11 : f32 to vector<128x128xf32>
    %15 = arith.maximumf %13, %14 : vector<128x128xf32>
    %16 = arith.truncf %15 : vector<128x128xf32> to vector<128x128xbf16>
    %c0_12 = arith.constant 0 : index
    %c0_13 = arith.constant 0 : index
    %17 = vector.load %arg6[%c0_12, %c0_13] : memref<128x128xbf16, #tpu.memory_space<vmem>>, vector<128x128xbf16>
    %cst_14 = arith.constant dense<0.000000e+00> : vector<128x128xf32>
    %18 = tpu.matmul %16, %17, %cst_14 {dimension_numbers = #tpu.dot_dimension_numbers<[1], [0], [0], [1], [0, 0, 1, 1], [], []>} : vector<128x128xbf16>, vector<128x128xbf16>, vector<128x128xf32> -> vector<128x128xf32>
    %c0_15 = arith.constant 0 : index
    %c0_16 = arith.constant 0 : index
    %19 = vector.load %arg7[%c0_15, %c0_16] : memref<1x128xf32, #tpu.memory_space<vmem>>, vector<1x128xf32>
    %20 = vector.broadcast %19 : vector<1x128xf32> to vector<128x128xf32>
    %21 = arith.addf %18, %20 : vector<128x128xf32>
    %c0_17 = arith.constant 0 : index
    %c0_18 = arith.constant 0 : index
    %22 = vector.load %arg8[%c0_17, %c0_18] : memref<128x128xf32, #tpu.memory_space<vmem>>, vector<128x128xf32>
    tpu.vector_store %arg8[%c0_17, %c0_18], %21 {strides = array<i32>} : memref<128x128xf32, #tpu.memory_space<vmem>>, vector<128x128xf32>,
    return
  }
  func.func @transform_0(%arg0: i32) -> (i32, i32) {
    %c0_i32 = arith.constant 0 : i32
    %c0_i32_0 = arith.constant 0 : i32
    return %arg0, %c0_i32 : i32, i32
  }
  func.func @transform_1(%arg0: i32) -> (i32, i32) {
    %c0_i32 = arith.constant 0 : i32
    %c0_i32_0 = arith.constant 0 : i32
    %c0_i32_1 = arith.constant 0 : i32
    return %c0_i32, %c0_i32_0 : i32, i32
  }
  func.func @transform_2(%arg0: i32) -> (i32, i32) {
    %c0_i32 = arith.constant 0 : i32
    %c0_i32_0 = arith.constant 0 : i32
    %c0_i32_1 = arith.constant 0 : i32
    return %c0_i32, %c0_i32_0 : i32, i32
  }
  func.func @transform_3(%arg0: i32) -> (i32, i32) {
    %c0_i32 = arith.constant 0 : i32
    %c0_i32_0 = arith.constant 0 : i32
    %c0_i32_1 = arith.constant 0 : i32
    return %c0_i32, %c0_i32_0 : i32, i32
  }
  func.func @transform_4(%arg0: i32) -> (i32, i32) {
    %c0_i32 = arith.constant 0 : i32
    %c0_i32_0 = arith.constant 0 : i32
    %c0_i32_1 = arith.constant 0 : i32
    return %c0_i32, %c0_i32_0 : i32, i32
  }
  func.func @transform_5(%arg0: i32) -> (i32, i32) {
    %c0_i32 = arith.constant 0 : i32
    %c0_i32_0 = arith.constant 0 : i32
    %c0_i32_1 = arith.constant 0 : i32
    return %c0_i32, %c0_i32_0 : i32, i32
  }
  func.func @transform_6(%arg0: i32) -> (i32, i32) {
    %c0_i32 = arith.constant 0 : i32
    %c0_i32_0 = arith.constant 0 : i32
    %c0_i32_1 = arith.constant 0 : i32
    return %c0_i32, %c0_i32_0 : i32, i32
  }
  func.func @transform_7(%arg0: i32) -> (i32, i32) {
    %c0_i32 = arith.constant 0 : i32
    %c0_i32_0 = arith.constant 0 : i32
    return %arg0, %c0_i32 : i32, i32
  }
}

module attributes {stable_mosaic.version = 11 : i64} {
  func.func @fnn_kernel(%arg0: i32, %arg1: memref<128x128xbf16, #tpu.memory_space<vmem>>, %arg2: memref<128x128xbf16, #tpu.memory_space<vmem>>, %arg3: memref<1x128xf32, #tpu.memory_space<vmem>>, %arg4: memref<128x128xbf16, #tpu.memory_space<vmem>>, %arg5: memref<1x128xf32, #tpu.memory_space<vmem>>, %arg6: memref<128x128xbf16, #tpu.memory_space<vmem>>, %arg7: memref<1x128xf32, #tpu.memory_space<vmem>>, %arg8: memref<128x128xf32, #tpu.memory_space<vmem>>) attributes {dimension_semantics = [#tpu.dimension_semantics<parallel>], iteration_bounds = array<i64: 1>, scalar_prefetch = 0 : i64, scratch_operands = 0 : i64, tpu.core_type = #tpu.core_type<tc>, window_params = [{transform_indices = @transform_0, window_bounds = array<i64: 128, 128>}, {pipeline_mode = #tpu.pipeline_mode<synchronous>, transform_indices = @transform_1, window_bounds = array<i64: 128, 128>}, {pipeline_mode = #tpu.pipeline_mode<synchronous>, transform_indices = @transform_2, window_bounds = array<i64: 1, 128>}, {pipeline_mode = #tpu.pipeline_mode<synchronous>, transform_indices = @transform_3, window_bounds = array<i64: 128, 128>}, {pipeline_mode = #tpu.pipeline_mode<synchronous>, transform_indices = @transform_4, window_bounds = array<i64: 1, 128>}, {pipeline_mode = #tpu.pipeline_mode<synchronous>, transform_indices = @transform_5, window_bounds = array<i64: 128, 128>}, {pipeline_mode = #tpu.pipeline_mode<synchronous>, transform_indices = @transform_6, window_bounds = array<i64: 1, 128>}, {transform_indices = @transform_7, window_bounds = array<i64: 128, 128>}]} {
    %c0 = arith.constant 0 : index
    %c0_0 = arith.constant 0 : index
    %0 = vector.load %arg1[%c0, %c0_0] : memref<128x128xbf16, #tpu.memory_space<vmem>>, vector<128x128xbf16>
    %c0_1 = arith.constant 0 : index
    %c0_2 = arith.constant 0 : index
    %1 = vector.load %arg2[%c0_1, %c0_2] : memref<128x128xbf16, #tpu.memory_space<vmem>>, vector<128x128xbf16>
    %cst = arith.constant dense<0.000000e+00> : vector<128x128xf32>
    %2 = tpu.matmul %0, %1, %cst {dimension_numbers = #tpu.dot_dimension_numbers<[1], [0], [0], [1], [0, 0, 1, 1], [], []>} : vector<128x128xbf16>, vector<128x128xbf16>, vector<128x128xf32> -> vector<128x128xf32>
    %c0_3 = arith.constant 0 : index
    %c0_4 = arith.constant 0 : index
    %3 = vector.load %arg3[%c0_3, %c0_4] : memref<1x128xf32, #tpu.memory_space<vmem>>, vector<1x128xf32>
    %4 = vector.broadcast %3 : vector<1x128xf32> to vector<128x128xf32>
    %5 = arith.addf %2, %4 : vector<128x128xf32>
    %cst_5 = arith.constant 0.000000e+00 : f32
    %6 = vector.broadcast %cst_5 : f32 to vector<128x128xf32>
    %7 = arith.maximumf %5, %6 : vector<128x128xf32>
    %8 = arith.truncf %7 : vector<128x128xf32> to vector<128x128xbf16>
    %c0_6 = arith.constant 0 : index
    %c0_7 = arith.constant 0 : index
    %9 = vector.load %arg4[%c0_6, %c0_7] : memref<128x128xbf16, #tpu.memory_space<vmem>>, vector<128x128xbf16>
    %cst_8 = arith.constant dense<0.000000e+00> : vector<128x128xf32>
    %10 = tpu.matmul %8, %9, %cst_8 {dimension_numbers = #tpu.dot_dimension_numbers<[1], [0], [0], [1], [0, 0, 1, 1], [], []>} : vector<128x128xbf16>, vector<128x128xbf16>, vector<128x128xf32> -> vector<128x128xf32>
    %c0_9 = arith.constant 0 : index
    %c0_10 = arith.constant 0 : index
    %11 = vector.load %arg5[%c0_9, %c0_10] : memref<1x128xf32, #tpu.memory_space<vmem>>, vector<1x128xf32>
    %12 = vector.broadcast %11 : vector<1x128xf32> to vector<128x128xf32>
    %13 = arith.addf %10, %12 : vector<128x128xf32>
    %cst_11 = arith.constant 0.000000e+00 : f32
    %14 = vector.broadcast %cst_11 : f32 to vector<128x128xf32>
    %15 = arith.maximumf %13, %14 : vector<128x128xf32>
    %16 = arith.truncf %15 : vector<128x128xf32> to vector<128x128xbf16>
    %c0_12 = arith.constant 0 : index
    %c0_13 = arith.constant 0 : index
    %17 = vector.load %arg6[%c0_12, %c0_13] : memref<128x128xbf16, #tpu.memory_space<vmem>>, vector<128x128xbf16>
    %cst_14 = arith.constant dense<0.000000e+00> : vector<128x128xf32>
    %18 = tpu.matmul %16, %17, %cst_14 {dimension_numbers = #tpu.dot_dimension_numbers<[1], [0], [0], [1], [0, 0, 1, 1], [], []>} : vector<128x128xbf16>, vector<128x128xbf16>, vector<128x128xf32> -> vector<128x128xf32>
    %c0_15 = arith.constant 0 : index
    %c0_16 = arith.constant 0 : index
    %19 = vector.load %arg7[%c0_15, %c0_16] : memref<1x128xf32, #tpu.memory_space<vmem>>, vector<1x128xf32>
    %20 = vector.broadcast %19 : vector<1x128xf32> to vector<128x128xf32>
    %21 = arith.addf %18, %20 : vector<128x128xf32>
    %c0_17 = arith.constant 0 : index
    %c0_18 = arith.constant 0 : index
    %22 = vector.load %arg8[%c0_17, %c0_18] : memref<128x128xf32, #tpu.memory_space<vmem>>, vector<128x128xf32>
    tpu.vector_store %arg8[%c0_17, %c0_18], %21 {strides = array<i32>} : memref<128x128xf32, #tpu.memory_space<vmem>>, vector<128x128xf32>,
    return
  }
  func.func @transform_0(%arg0: i32) -> (i32, i32) {
    %c0_i32 = arith.constant 0 : i32
    %c0_i32_0 = arith.constant 0 : i32
    return %arg0, %c0_i32 : i32, i32
  }
  func.func @transform_1(%arg0: i32) -> (i32, i32) {
    %c0_i32 = arith.constant 0 : i32
    %c0_i32_0 = arith.constant 0 : i32
    %c0_i32_1 = arith.constant 0 : i32
    return %c0_i32, %c0_i32_0 : i32, i32
  }
  func.func @transform_2(%arg0: i32) -> (i32, i32) {
    %c0_i32 = arith.constant 0 : i32
    %c0_i32_0 = arith.constant 0 : i32
    %c0_i32_1 = arith.constant 0 : i32
    return %c0_i32, %c0_i32_0 : i32, i32
  }
  func.func @transform_3(%arg0: i32) -> (i32, i32) {
    %c0_i32 = arith.constant 0 : i32
    %c0_i32_0 = arith.constant 0 : i32
    %c0_i32_1 = arith.constant 0 : i32
    return %c0_i32, %c0_i32_0 : i32, i32
  }
  func.func @transform_4(%arg0: i32) -> (i32, i32) {
    %c0_i32 = arith.constant 0 : i32
    %c0_i32_0 = arith.constant 0 : i32
    %c0_i32_1 = arith.constant 0 : i32
    return %c0_i32, %c0_i32_0 : i32, i32
  }
  func.func @transform_5(%arg0: i32) -> (i32, i32) {
    %c0_i32 = arith.constant 0 : i32
    %c0_i32_0 = arith.constant 0 : i32
    %c0_i32_1 = arith.constant 0 : i32
    return %c0_i32, %c0_i32_0 : i32, i32
  }
  func.func @transform_6(%arg0: i32) -> (i32, i32) {
    %c0_i32 = arith.constant 0 : i32
    %c0_i32_0 = arith.constant 0 : i32
    %c0_i32_1 = arith.constant 0 : i32
    return %c0_i32, %c0_i32_0 : i32, i32
  }
  func.func @transform_7(%arg0: i32) -> (i32, i32) {
    %c0_i32 = arith.constant 0 : i32
    %c0_i32_0 = arith.constant 0 : i32
    return %arg0, %c0_i32 : i32, i32
  }
}

</mosaic_0001>

<llo_original>
// kernel: tpu_custom_call.1
$region0: #{tpu_custom_call.1}
  #allocation0 [shape = 'u32[]', space=smem, size = 0x4, offset = 0x4, fixed_abs, tag = 'smem constant byte address 0x4 - core index']
  #allocation1 [shape = 'u32[72,128]{1,0:T(1,128)}', space=vmem, size = 0x9000, scoped, tag = 'internal scratch']
  %s0 = inlined_call_operand.hbm [shape: bf16[128,128], index: 0, kind: input, shape index: {}]
  %s1 = inlined_call_operand.hbm [shape: bf16[128,128], index: 1, kind: input, shape index: {}]
  %s2 = inlined_call_operand.vmem [shape: f32[1,128], index: 2, kind: input, shape index: {}]
  %s3 = inlined_call_operand.hbm [shape: bf16[128,128], index: 3, kind: input, shape index: {}]
  %s4 = inlined_call_operand.vmem [shape: f32[1,128], index: 4, kind: input, shape index: {}]
  %s5 = inlined_call_operand.hbm [shape: bf16[128,128], index: 5, kind: input, shape index: {}]
  %s6 = inlined_call_operand.vmem [shape: f32[1,128], index: 6, kind: input, shape index: {}]
  %s7 = inlined_call_operand.hbm [shape: f32[128,128], index: 7, kind: output, shape index: {}]
  %s8 = sld [smem:[#allocation0]]
  $region54: #{tpu_custom_call.1} parent=0
    _
  %s10 = ssub.s32 1, %s8
  %s11 = scalar_select 0, %s10, %s8
  $region1: #{tpu_custom_call.1} parent=0
    #allocation2 [shape = 'u8[32768]{0}', space=vmem, size = 0x8000, scoped, tag = 'input window, operand 0, single buffered']
    #allocation3 [shape = 's32[1]{0}', space=sflag, size = 0x4, scoped, tag = 'scoped memory for tpu_custom_call.1']
    #allocation4 [shape = 's32[1]{0}', space=sflag, size = 0x4, scoped, tag = 'scoped memory for tpu_custom_call.1']
    #allocation5 [shape = 'u8[32768]{0}', space=vmem, size = 0x8000, scoped, tag = 'input window, operand 1, single buffered']
    #allocation6 [shape = 's32[1]{0}', space=sflag, size = 0x4, scoped, tag = 'scoped memory for tpu_custom_call.1']
    #allocation7 [shape = 'u8[32768]{0}', space=vmem, size = 0x8000, scoped, tag = 'input window, operand 3, single buffered']
    #allocation8 [shape = 'u8[32768]{0}', space=vmem, size = 0x8000, scoped, tag = 'input window, operand 5, single buffered']
    #allocation9 [shape = 's32[1]{0}', space=sflag, size = 0x4, scoped, tag = 'scoped memory for tpu_custom_call.1']
    #allocation10 [shape = 'u8[65536]{0}', space=vmem, size = 0x10000, scoped, tag = 'output window, operand 0, single buffered']
    %12 = vsyncpa [#allocation3], 0
    %13 = vsyncpa [#allocation6], 0
    %14 = vsyncpa [#allocation9], 0
    %15 = vsyncpa [#allocation4], 0
    // Predicated region
    $region2: #{tpu_custom_call.1} parent=1 // pred_check
      _
    $region3: #{tpu_custom_call.1} parent=1 // pred_check_branch
      %17 = sbr.rel (0) target = $region5
    $region4: #{tpu_custom_call.1} parent=1 // pred_region
      %19 = vsyncadd [#allocation3], 0
      %s20 = sshll.u32 %s0, 4
      %s21 = int_to_ptr.hbm [resolvable:$true] %s20
      %s22 = sshll.u32 [#allocation2], 4
      %s23 = int_to_ptr.vmem [resolvable:$true] %s22
      %28 = dma.hbm_to_vmem [thread:$0]  %s21, 1024, %s23, [#allocation3], 64, 64, 4
    $region5: #{tpu_custom_call.1} parent=1 // pred_fallthru
      _
    // Predicated region
    $region6: #{tpu_custom_call.1} parent=1 // pred_check
      _
    $region7: #{tpu_custom_call.1} parent=1 // pred_check_branch
      %30 = sbr.rel (0) target = $region9
    $region8: #{tpu_custom_call.1} parent=1 // pred_region
      %32 = vsyncadd [#allocation6], 0
      %s33 = sshll.u32 %s1, 4
      %s34 = int_to_ptr.hbm [resolvable:$true] %s33
      %s35 = sshll.u32 [#allocation5], 4
      %s36 = int_to_ptr.vmem [resolvable:$true] %s35
      %41 = dma.hbm_to_vmem [thread:$0]  %s34, 1024, %s36, [#allocation6], 64, 64, 4
    $region9: #{tpu_custom_call.1} parent=1 // pred_fallthru
      _
    // Predicated region
    $region10: #{tpu_custom_call.1} parent=1 // pred_check
      _
    $region11: #{tpu_custom_call.1} parent=1 // pred_check_branch
      %43 = sbr.rel (0) target = $region13
    $region12: #{tpu_custom_call.1} parent=1 // pred_region
      _
    $region13: #{tpu_custom_call.1} parent=1 // pred_fallthru
      _
    // Predicated region
    $region14: #{tpu_custom_call.1} parent=1 // pred_check
      _
    $region15: #{tpu_custom_call.1} parent=1 // pred_check_branch
      %45 = sbr.rel (0) target = $region17
    $region16: #{tpu_custom_call.1} parent=1 // pred_region
      %47 = vsyncadd [#allocation6], 0
      %s48 = sshll.u32 %s3, 4
      %s49 = int_to_ptr.hbm [resolvable:$true] %s48
      %s50 = sshll.u32 [#allocation7], 4
      %s51 = int_to_ptr.vmem [resolvable:$true] %s50
      %56 = dma.hbm_to_vmem [thread:$0]  %s49, 1024, %s51, [#allocation6], 64, 64, 4
    $region17: #{tpu_custom_call.1} parent=1 // pred_fallthru
      _
    // Predicated region
    $region18: #{tpu_custom_call.1} parent=1 // pred_check
      _
    $region19: #{tpu_custom_call.1} parent=1 // pred_check_branch
      %58 = sbr.rel (0) target = $region21
    $region20: #{tpu_custom_call.1} parent=1 // pred_region
      _
    $region21: #{tpu_custom_call.1} parent=1 // pred_fallthru
      _
    // Predicated region
    $region22: #{tpu_custom_call.1} parent=1 // pred_check
      _
    $region23: #{tpu_custom_call.1} parent=1 // pred_check_branch
      %60 = sbr.rel (0) target = $region25
    $region24: #{tpu_custom_call.1} parent=1 // pred_region
      %62 = vsyncadd [#allocation9], 0
      %s63 = sshll.u32 %s5, 4
      %s64 = int_to_ptr.hbm [resolvable:$true] %s63
      %s65 = sshll.u32 [#allocation8], 4
      %s66 = int_to_ptr.vmem [resolvable:$true] %s65
      %71 = dma.hbm_to_vmem [thread:$0]  %s64, 1024, %s66, [#allocation9], 64, 64, 4
    $region25: #{tpu_custom_call.1} parent=1 // pred_fallthru
      _
    // Predicated region
    $region26: #{tpu_custom_call.1} parent=1 // pred_check
      _
    $region27: #{tpu_custom_call.1} parent=1 // pred_check_branch
      %73 = sbr.rel (0) target = $region29
    $region28: #{tpu_custom_call.1} parent=1 // pred_region
      _
    $region29: #{tpu_custom_call.1} parent=1 // pred_fallthru
      _
    // Predicated region
    $region30: #{tpu_custom_call.1} parent=1 // pred_check
      _
    $region31: #{tpu_custom_call.1} parent=1 // pred_check_branch
      %75 = sbr.rel (0) target = $region33
    $region32: #{tpu_custom_call.1} parent=1 // pred_region
      %77 = dma.done [#allocation3], 1024
    $region33: #{tpu_custom_call.1} parent=1 // pred_fallthru
      _
    // Predicated region
    $region34: #{tpu_custom_call.1} parent=1 // pred_check
      _
    $region35: #{tpu_custom_call.1} parent=1 // pred_check_branch
      %79 = sbr.rel (0) target = $region37
    $region36: #{tpu_custom_call.1} parent=1 // pred_region
      %81 = dma.done [#allocation6], 1024
    $region37: #{tpu_custom_call.1} parent=1 // pred_fallthru
      _
    // Predicated region
    $region38: #{tpu_custom_call.1} parent=1 // pred_check
      _
    $region39: #{tpu_custom_call.1} parent=1 // pred_check_branch
      %83 = sbr.rel (0) target = $region41
    $region40: #{tpu_custom_call.1} parent=1 // pred_region
      %85 = dma.done [#allocation6], 1024
    $region41: #{tpu_custom_call.1} parent=1 // pred_fallthru
      _
    // Predicated region
    $region42: #{tpu_custom_call.1} parent=1 // pred_check
      _
    $region43: #{tpu_custom_call.1} parent=1 // pred_check_branch
      %87 = sbr.rel (0) target = $region45
    $region44: #{tpu_custom_call.1} parent=1 // pred_region
      %89 = dma.done [#allocation9], 1024
    $region45: #{tpu_custom_call.1} parent=1 // pred_fallthru
      _
    %v90 = vld [vmem:[#allocation2] sm:$0xf]
    %v91 = vld [vmem:[#allocation2 + $0x4] sm:$0xf]
    %v92 = vld [vmem:[#allocation2 + $0x8] sm:$0xf]
    %v93 = vld [vmem:[#allocation2 + $0xc] sm:$0xf]
    %v94 = vld [vmem:[#allocation2 + $0x10] sm:$0xf]
    %v95 = vld [vmem:[#allocation2 + $0x14] sm:$0xf]
    %v96 = vld [vmem:[#allocation2 + $0x18] sm:$0xf]
    %v97 = vld [vmem:[#allocation2 + $0x1c] sm:$0xf]
    %v98 = vld [vmem:[#allocation2 + $0x20] sm:$0xf]
    %v99 = vld [vmem:[#allocation2 + $0x24] sm:$0xf]
    %v100 = vld [vmem:[#allocation2 + $0x28] sm:$0xf]
    %v101 = vld [vmem:[#allocation2 + $0x2c] sm:$0xf]
    %v102 = vld [vmem:[#allocation2 + $0x30] sm:$0xf]
    %v103 = vld [vmem:[#allocation2 + $0x34] sm:$0xf]
    %v104 = vld [vmem:[#allocation2 + $0x38] sm:$0xf]
    %v105 = vld [vmem:[#allocation2 + $0x3c] sm:$0xf]
    %v106 = vld [vmem:[#allocation5] sm:$0xf]
    %v107 = vld [vmem:[#allocation5 + $0x4] sm:$0xf]
    %v108 = vld [vmem:[#allocation5 + $0x8] sm:$0xf]
    %v109 = vld [vmem:[#allocation5 + $0xc] sm:$0xf]
    %v110 = vld [vmem:[#allocation5 + $0x10] sm:$0xf]
    %v111 = vld [vmem:[#allocation5 + $0x14] sm:$0xf]
    %v112 = vld [vmem:[#allocation5 + $0x18] sm:$0xf]
    %v113 = vld [vmem:[#allocation5 + $0x1c] sm:$0xf]
    %v114 = vld [vmem:[#allocation5 + $0x20] sm:$0xf]
    %v115 = vld [vmem:[#allocation5 + $0x24] sm:$0xf]
    %v116 = vld [vmem:[#allocation5 + $0x28] sm:$0xf]
    %v117 = vld [vmem:[#allocation5 + $0x2c] sm:$0xf]
    %v118 = vld [vmem:[#allocation5 + $0x30] sm:$0xf]
    %v119 = vld [vmem:[#allocation5 + $0x34] sm:$0xf]
    %v120 = vld [vmem:[#allocation5 + $0x38] sm:$0xf]
    %v121 = vld [vmem:[#allocation5 + $0x3c] sm:$0xf]
    %v122 = vld [vmem:[%s2] sm:$0x1]
    %v124 = vperm.slane %v122, 0
    %v142 = vunpack.c.l.b16 %v90
    %v143 = vunpack.c.l.b16 %v91
    %v144 = vunpack.c.l.b16 %v92
    %v145 = vunpack.c.l.b16 %v93
    %v146 = vunpack.c.l.b16 %v94
    %v147 = vunpack.c.l.b16 %v95
    %v148 = vunpack.c.l.b16 %v96
    %v149 = vunpack.c.l.b16 %v97
    %v150 = vunpack.c.l.b16 %v98
    %v151 = vunpack.c.l.b16 %v99
    %v152 = vunpack.c.l.b16 %v100
    %v153 = vunpack.c.l.b16 %v101
    %v154 = vunpack.c.l.b16 %v102
    %v155 = vunpack.c.l.b16 %v103
    %v156 = vunpack.c.l.b16 %v104
    %v157 = vunpack.c.l.b16 %v105
    %v158 = vpack.c.b16 %v143, %v142
    %v159 = vpack.c.b16 %v145, %v144
    %v160 = vpack.c.b16 %v147, %v146
    %v161 = vpack.c.b16 %v149, %v148
    %v162 = vpack.c.b16 %v151, %v150
    %v163 = vpack.c.b16 %v153, %v152
    %v164 = vpack.c.b16 %v155, %v154
    %v165 = vpack.c.b16 %v157, %v156
    %v190 = vunpack.c.l.b16 %v106
    %v191 = vunpack.c.l.b16 %v107
    %v192 = vunpack.c.l.b16 %v108
    %v193 = vunpack.c.l.b16 %v109
    %v194 = vunpack.c.l.b16 %v110
    %v195 = vunpack.c.l.b16 %v111
    %v196 = vunpack.c.l.b16 %v112
    %v197 = vunpack.c.l.b16 %v113
    %v198 = vunpack.c.l.b16 %v114
    %v199 = vunpack.c.l.b16 %v115
    %v200 = vunpack.c.l.b16 %v116
    %v201 = vunpack.c.l.b16 %v117
    %v202 = vunpack.c.l.b16 %v118
    %v203 = vunpack.c.l.b16 %v119
    %v204 = vunpack.c.l.b16 %v120
    %v205 = vunpack.c.l.b16 %v121
    %v206 = vpack.c.b16 %v191, %v190
    %v207 = vpack.c.b16 %v193, %v192
    %v208 = vpack.c.b16 %v195, %v194
    %v209 = vpack.c.b16 %v197, %v196
    %v210 = vpack.c.b16 %v199, %v198
    %v211 = vpack.c.b16 %v201, %v200
    %v212 = vpack.c.b16 %v203, %v202
    %v213 = vpack.c.b16 %v205, %v204
    %222 = vmatpush.bf16.msra.mxu0 %v213
    %223 = vmatpush.bf16.msra.mxu0 %v212
    %224 = vmatpush.bf16.msra.mxu0 %v211
    %225 = vmatpush.bf16.msra.mxu0 %v210
    %226 = vmatpush.bf16.msra.mxu0 %v209
    %227 = vmatpush.bf16.msra.mxu0 %v208
    %228 = vmatpush.bf16.msra.mxu0 %v207
    %229 = vmatpush.bf16.msra.mxu0 %v206
    %230 = vmatmul.bf16.gmra.mxu0 %v158
    %v231 = vpop.f32.mrf.mxu0
    %v232 = vadd.f32 %v124, %v231
    %v233 = vpop.f32.mrf.mxu0
    %v234 = vadd.f32 %v124, %v233
    %235 = vmatmul.bf16.gmra.mxu0 %v159
    %v236 = vpop.f32.mrf.mxu0
    %v237 = vadd.f32 %v124, %v236
    %v238 = vpop.f32.mrf.mxu0
    %v239 = vadd.f32 %v124, %v238
    %240 = vmatmul.bf16.gmra.mxu0 %v160
    %v241 = vpop.f32.mrf.mxu0
    %v242 = vadd.f32 %v124, %v241
    %v243 = vpop.f32.mrf.mxu0
    %v244 = vadd.f32 %v124, %v243
    %245 = vmatmul.bf16.gmra.mxu0 %v161
    %v246 = vpop.f32.mrf.mxu0
    %v247 = vadd.f32 %v124, %v246
    %v248 = vpop.f32.mrf.mxu0
    %v249 = vadd.f32 %v124, %v248
    %250 = vmatmul.bf16.gmra.mxu0 %v162
    %v251 = vpop.f32.mrf.mxu0
    %v252 = vadd.f32 %v124, %v251
    %v253 = vpop.f32.mrf.mxu0
    %v254 = vadd.f32 %v124, %v253
    %255 = vmatmul.bf16.gmra.mxu0 %v163
    %v256 = vpop.f32.mrf.mxu0
    %v257 = vadd.f32 %v124, %v256
    %v258 = vpop.f32.mrf.mxu0
    %v259 = vadd.f32 %v124, %v258
    %260 = vmatmul.bf16.gmra.mxu0 %v164
    %v261 = vpop.f32.mrf.mxu0
    %v262 = vadd.f32 %v124, %v261
    %v263 = vpop.f32.mrf.mxu0
    %v264 = vadd.f32 %v124, %v263
    %265 = vmatmul.bf16.gmra.mxu0 %v165
    %v266 = vpop.f32.mrf.mxu0
    %v267 = vadd.f32 %v124, %v266
    %v268 = vpop.f32.mrf.mxu0
    %v269 = vadd.f32 %v124, %v268
    %270 = vdwg.mxu0
    %v271 = vmax.f32 %v232, 0.0
    %v272 = vmax.f32 %v234, 0.0
    %v273 = vmax.f32 %v237, 0.0
    %v274 = vmax.f32 %v239, 0.0
    %v275 = vmax.f32 %v242, 0.0
    %v276 = vmax.f32 %v244, 0.0
    %v277 = vmax.f32 %v247, 0.0
    %v278 = vmax.f32 %v249, 0.0
    %v279 = vmax.f32 %v252, 0.0
    %v280 = vmax.f32 %v254, 0.0
    %v281 = vmax.f32 %v257, 0.0
    %v282 = vmax.f32 %v259, 0.0
    %v283 = vmax.f32 %v262, 0.0
    %v284 = vmax.f32 %v264, 0.0
    %v285 = vmax.f32 %v267, 0.0
    %v286 = vmax.f32 %v269, 0.0
    %v287 = vpack.c.bf16 %v272, %v271
    %v288 = vpack.c.bf16 %v274, %v273
    %v289 = vpack.c.bf16 %v276, %v275
    %v290 = vpack.c.bf16 %v278, %v277
    %v291 = vpack.c.bf16 %v280, %v279
    %v292 = vpack.c.bf16 %v282, %v281
    %v293 = vpack.c.bf16 %v284, %v283
    %v294 = vpack.c.bf16 %v286, %v285
    %v295 = vld [vmem:[#allocation7] sm:$0xf]
    %v296 = vld [vmem:[#allocation7 + $0x4] sm:$0xf]
    %v297 = vld [vmem:[#allocation7 + $0x8] sm:$0xf]
    %v298 = vld [vmem:[#allocation7 + $0xc] sm:$0xf]
    %v299 = vld [vmem:[#allocation7 + $0x10] sm:$0xf]
    %v300 = vld [vmem:[#allocation7 + $0x14] sm:$0xf]
    %v301 = vld [vmem:[#allocation7 + $0x18] sm:$0xf]
    %v302 = vld [vmem:[#allocation7 + $0x1c] sm:$0xf]
    %v303 = vld [vmem:[#allocation7 + $0x20] sm:$0xf]
    %v304 = vld [vmem:[#allocation7 + $0x24] sm:$0xf]
    %v305 = vld [vmem:[#allocation7 + $0x28] sm:$0xf]
    %v306 = vld [vmem:[#allocation7 + $0x2c] sm:$0xf]
    %v307 = vld [vmem:[#allocation7 + $0x30] sm:$0xf]
    %v308 = vld [vmem:[#allocation7 + $0x34] sm:$0xf]
    %v309 = vld [vmem:[#allocation7 + $0x38] sm:$0xf]
    %v310 = vld [vmem:[#allocation7 + $0x3c] sm:$0xf]
    %v311 = vld [vmem:[%s4] sm:$0x1]
    %v313 = vperm.slane %v311, 0
    %v331 = vunpack.c.l.b16 %v295
    %v332 = vunpack.c.l.b16 %v296
    %v333 = vunpack.c.l.b16 %v297
    %v334 = vunpack.c.l.b16 %v298
    %v335 = vunpack.c.l.b16 %v299
    %v336 = vunpack.c.l.b16 %v300
    %v337 = vunpack.c.l.b16 %v301
    %v338 = vunpack.c.l.b16 %v302
    %v339 = vunpack.c.l.b16 %v303
    %v340 = vunpack.c.l.b16 %v304
    %v341 = vunpack.c.l.b16 %v305
    %v342 = vunpack.c.l.b16 %v306
    %v343 = vunpack.c.l.b16 %v307
    %v344 = vunpack.c.l.b16 %v308
    %v345 = vunpack.c.l.b16 %v309
    %v346 = vunpack.c.l.b16 %v310
    %v347 = vpack.c.b16 %v332, %v331
    %v348 = vpack.c.b16 %v334, %v333
    %v349 = vpack.c.b16 %v336, %v335
    %v350 = vpack.c.b16 %v338, %v337
    %v351 = vpack.c.b16 %v340, %v339
    %v352 = vpack.c.b16 %v342, %v341
    %v353 = vpack.c.b16 %v344, %v343
    %v354 = vpack.c.b16 %v346, %v345
    %363 = vmatpush.bf16.msra.mxu0 %v354
    %364 = vmatpush.bf16.msra.mxu0 %v353
    %365 = vmatpush.bf16.msra.mxu0 %v352
    %366 = vmatpush.bf16.msra.mxu0 %v351
    %367 = vmatpush.bf16.msra.mxu0 %v350
    %368 = vmatpush.bf16.msra.mxu0 %v349
    %369 = vmatpush.bf16.msra.mxu0 %v348
    %370 = vmatpush.bf16.msra.mxu0 %v347
    %371 = vmatmul.bf16.gmra.mxu0 %v287
    %v372 = vpop.f32.mrf.mxu0
    %v373 = vadd.f32 %v313, %v372
    %v374 = vpop.f32.mrf.mxu0
    %v375 = vadd.f32 %v313, %v374
    %376 = vmatmul.bf16.gmra.mxu0 %v288
    %v377 = vpop.f32.mrf.mxu0
    %v378 = vadd.f32 %v313, %v377
    %v379 = vpop.f32.mrf.mxu0
    %v380 = vadd.f32 %v313, %v379
    %381 = vmatmul.bf16.gmra.mxu0 %v289
    %v382 = vpop.f32.mrf.mxu0
    %v383 = vadd.f32 %v313, %v382
    %v384 = vpop.f32.mrf.mxu0
    %v385 = vadd.f32 %v313, %v384
    %386 = vmatmul.bf16.gmra.mxu0 %v290
    %v387 = vpop.f32.mrf.mxu0
    %v388 = vadd.f32 %v313, %v387
    %v389 = vpop.f32.mrf.mxu0
    %v390 = vadd.f32 %v313, %v389
    %391 = vmatmul.bf16.gmra.mxu0 %v291
    %v392 = vpop.f32.mrf.mxu0
    %v393 = vadd.f32 %v313, %v392
    %v394 = vpop.f32.mrf.mxu0
    %v395 = vadd.f32 %v313, %v394
    %396 = vmatmul.bf16.gmra.mxu0 %v292
    %v397 = vpop.f32.mrf.mxu0
    %v398 = vadd.f32 %v313, %v397
    %v399 = vpop.f32.mrf.mxu0
    %v400 = vadd.f32 %v313, %v399
    %401 = vmatmul.bf16.gmra.mxu0 %v293
    %v402 = vpop.f32.mrf.mxu0
    %v403 = vadd.f32 %v313, %v402
    %v404 = vpop.f32.mrf.mxu0
    %v405 = vadd.f32 %v313, %v404
    %406 = vmatmul.bf16.gmra.mxu0 %v294
    %v407 = vpop.f32.mrf.mxu0
    %v408 = vadd.f32 %v313, %v407
    %v409 = vpop.f32.mrf.mxu0
    %v410 = vadd.f32 %v313, %v409
    %411 = vdwg.mxu0
    %v412 = vmax.f32 %v373, 0.0
    %v413 = vmax.f32 %v375, 0.0
    %v414 = vmax.f32 %v378, 0.0
    %v415 = vmax.f32 %v380, 0.0
    %v416 = vmax.f32 %v383, 0.0
    %v417 = vmax.f32 %v385, 0.0
    %v418 = vmax.f32 %v388, 0.0
    %v419 = vmax.f32 %v390, 0.0
    %v420 = vmax.f32 %v393, 0.0
    %v421 = vmax.f32 %v395, 0.0
    %v422 = vmax.f32 %v398, 0.0
    %v423 = vmax.f32 %v400, 0.0
    %v424 = vmax.f32 %v403, 0.0
    %v425 = vmax.f32 %v405, 0.0
    %v426 = vmax.f32 %v408, 0.0
    %v427 = vmax.f32 %v410, 0.0
    %v428 = vpack.c.bf16 %v413, %v412
    %v429 = vpack.c.bf16 %v415, %v414
    %v430 = vpack.c.bf16 %v417, %v416
    %v431 = vpack.c.bf16 %v419, %v418
    %v432 = vpack.c.bf16 %v421, %v420
    %v433 = vpack.c.bf16 %v423, %v422
    %v434 = vpack.c.bf16 %v425, %v424
    %v435 = vpack.c.bf16 %v427, %v426
    %v436 = vld [vmem:[#allocation8] sm:$0xf]
    %v437 = vld [vmem:[#allocation8 + $0x4] sm:$0xf]
    %v438 = vld [vmem:[#allocation8 + $0x8] sm:$0xf]
    %v439 = vld [vmem:[#allocation8 + $0xc] sm:$0xf]
    %v440 = vld [vmem:[#allocation8 + $0x10] sm:$0xf]
    %v441 = vld [vmem:[#allocation8 + $0x14] sm:$0xf]
    %v442 = vld [vmem:[#allocation8 + $0x18] sm:$0xf]
    %v443 = vld [vmem:[#allocation8 + $0x1c] sm:$0xf]
    %v444 = vld [vmem:[#allocation8 + $0x20] sm:$0xf]
    %v445 = vld [vmem:[#allocation8 + $0x24] sm:$0xf]
    %v446 = vld [vmem:[#allocation8 + $0x28] sm:$0xf]
    %v447 = vld [vmem:[#allocation8 + $0x2c] sm:$0xf]
    %v448 = vld [vmem:[#allocation8 + $0x30] sm:$0xf]
    %v449 = vld [vmem:[#allocation8 + $0x34] sm:$0xf]
    %v450 = vld [vmem:[#allocation8 + $0x38] sm:$0xf]
    %v451 = vld [vmem:[#allocation8 + $0x3c] sm:$0xf]
    %v452 = vld [vmem:[%s6] sm:$0x1]
    %v454 = vperm.slane %v452, 0
    %v472 = vunpack.c.l.b16 %v436
    %v473 = vunpack.c.l.b16 %v437
    %v474 = vunpack.c.l.b16 %v438
    %v475 = vunpack.c.l.b16 %v439
    %v476 = vunpack.c.l.b16 %v440
    %v477 = vunpack.c.l.b16 %v441
    %v478 = vunpack.c.l.b16 %v442
    %v479 = vunpack.c.l.b16 %v443
    %v480 = vunpack.c.l.b16 %v444
    %v481 = vunpack.c.l.b16 %v445
    %v482 = vunpack.c.l.b16 %v446
    %v483 = vunpack.c.l.b16 %v447
    %v484 = vunpack.c.l.b16 %v448
    %v485 = vunpack.c.l.b16 %v449
    %v486 = vunpack.c.l.b16 %v450
    %v487 = vunpack.c.l.b16 %v451
    %v488 = vpack.c.b16 %v473, %v472
    %v489 = vpack.c.b16 %v475, %v474
    %v490 = vpack.c.b16 %v477, %v476
    %v491 = vpack.c.b16 %v479, %v478
    %v492 = vpack.c.b16 %v481, %v480
    %v493 = vpack.c.b16 %v483, %v482
    %v494 = vpack.c.b16 %v485, %v484
    %v495 = vpack.c.b16 %v487, %v486
    %504 = vmatpush.bf16.msra.mxu0 %v495
    %505 = vmatpush.bf16.msra.mxu0 %v494
    %506 = vmatpush.bf16.msra.mxu0 %v493
    %507 = vmatpush.bf16.msra.mxu0 %v492
    %508 = vmatpush.bf16.msra.mxu0 %v491
    %509 = vmatpush.bf16.msra.mxu0 %v490
    %510 = vmatpush.bf16.msra.mxu0 %v489
    %511 = vmatpush.bf16.msra.mxu0 %v488
    %512 = vmatmul.bf16.gmra.mxu0 %v428
    %v513 = vpop.f32.mrf.mxu0
    %v514 = vadd.f32 %v454, %v513
    %v515 = vpop.f32.mrf.mxu0
    %v516 = vadd.f32 %v454, %v515
    %517 = vmatmul.bf16.gmra.mxu0 %v429
    %v518 = vpop.f32.mrf.mxu0
    %v519 = vadd.f32 %v454, %v518
    %v520 = vpop.f32.mrf.mxu0
    %v521 = vadd.f32 %v454, %v520
    %522 = vmatmul.bf16.gmra.mxu0 %v430
    %v523 = vpop.f32.mrf.mxu0
    %v524 = vadd.f32 %v454, %v523
    %v525 = vpop.f32.mrf.mxu0
    %v526 = vadd.f32 %v454, %v525
    %527 = vmatmul.bf16.gmra.mxu0 %v431
    %v528 = vpop.f32.mrf.mxu0
    %v529 = vadd.f32 %v454, %v528
    %v530 = vpop.f32.mrf.mxu0
    %v531 = vadd.f32 %v454, %v530
    %532 = vmatmul.bf16.gmra.mxu0 %v432
    %v533 = vpop.f32.mrf.mxu0
    %v534 = vadd.f32 %v454, %v533
    %v535 = vpop.f32.mrf.mxu0
    %v536 = vadd.f32 %v454, %v535
    %537 = vmatmul.bf16.gmra.mxu0 %v433
    %v538 = vpop.f32.mrf.mxu0
    %v539 = vadd.f32 %v454, %v538
    %v540 = vpop.f32.mrf.mxu0
    %v541 = vadd.f32 %v454, %v540
    %542 = vmatmul.bf16.gmra.mxu0 %v434
    %v543 = vpop.f32.mrf.mxu0
    %v544 = vadd.f32 %v454, %v543
    %v545 = vpop.f32.mrf.mxu0
    %v546 = vadd.f32 %v454, %v545
    %547 = vmatmul.bf16.gmra.mxu0 %v435
    %v548 = vpop.f32.mrf.mxu0
    %v549 = vadd.f32 %v454, %v548
    %v550 = vpop.f32.mrf.mxu0
    %v551 = vadd.f32 %v454, %v550
    %552 = vdwg.mxu0
    %553 = vst [vmem:[#allocation10] sm:$0xff] %v514
    %554 = vst [vmem:[#allocation10 + $0x8] sm:$0xff] %v516
    %555 = vst [vmem:[#allocation10 + $0x10] sm:$0xff] %v519
    %556 = vst [vmem:[#allocation10 + $0x18] sm:$0xff] %v521
    %557 = vst [vmem:[#allocation10 + $0x20] sm:$0xff] %v524
    %558 = vst [vmem:[#allocation10 + $0x28] sm:$0xff] %v526
    %559 = vst [vmem:[#allocation10 + $0x30] sm:$0xff] %v529
    %560 = vst [vmem:[#allocation10 + $0x38] sm:$0xff] %v531
    %561 = vst [vmem:[#allocation10 + $0x40] sm:$0xff] %v534
    %562 = vst [vmem:[#allocation10 + $0x48] sm:$0xff] %v536
    %563 = vst [vmem:[#allocation10 + $0x50] sm:$0xff] %v539
    %564 = vst [vmem:[#allocation10 + $0x58] sm:$0xff] %v541
    %565 = vst [vmem:[#allocation10 + $0x60] sm:$0xff] %v544
    %566 = vst [vmem:[#allocation10 + $0x68] sm:$0xff] %v546
    %567 = vst [vmem:[#allocation10 + $0x70] sm:$0xff] %v549
    %568 = vst [vmem:[#allocation10 + $0x78] sm:$0xff] %v551
    // Predicated region
    $region46: #{tpu_custom_call.1} parent=1 // pred_check
      _
    $region47: #{tpu_custom_call.1} parent=1 // pred_check_branch
      %570 = sbr.rel (0) target = $region49
    $region48: #{tpu_custom_call.1} parent=1 // pred_region
      %572 = vsyncadd [#allocation4], 0
      %s573 = sshll.u32 [#allocation10], 4
      %s574 = int_to_ptr.vmem [resolvable:$true] %s573
      %s575 = sshll.u32 %s7, 4
      %s576 = int_to_ptr.hbm [resolvable:$true] %s575
      %581 = dma.vmem_to_hbm [thread:$0]  %s574, 2048, %s576, [#allocation4], 128, 128, 8
    $region49: #{tpu_custom_call.1} parent=1 // pred_fallthru
      _
    // Predicated region
    $region50: #{tpu_custom_call.1} parent=1 // pred_check
      _
    $region51: #{tpu_custom_call.1} parent=1 // pred_check_branch
      %583 = sbr.rel (0) target = $region53
    $region52: #{tpu_custom_call.1} parent=1 // pred_region
      %585 = dma.done [#allocation4], 2048
    $region53: #{tpu_custom_call.1} parent=1 // pred_fallthru
      _
    %586 = vsyncpa [#allocation3], 1
    %587 = vsyncpa [#allocation6], 1
    %588 = vsyncpa [#allocation9], 1
    %589 = vsyncpa [#allocation4], 1

// kernel: tpu_custom_call.1
$region0: #{tpu_custom_call.1}
  #allocation0 [shape = 'u32[]', space=smem, size = 0x4, offset = 0x4, fixed_abs, tag = 'smem constant byte address 0x4 - core index']
  #allocation1 [shape = 'u32[72,128]{1,0:T(1,128)}', space=vmem, size = 0x9000, scoped, tag = 'internal scratch']
  %s0 = inlined_call_operand.hbm [shape: bf16[128,128], index: 0, kind: input, shape index: {}]
  %s1 = inlined_call_operand.hbm [shape: bf16[128,128], index: 1, kind: input, shape index: {}]
  %s2 = inlined_call_operand.vmem [shape: f32[1,128], index: 2, kind: input, shape index: {}]
  %s3 = inlined_call_operand.hbm [shape: bf16[128,128], index: 3, kind: input, shape index: {}]
  %s4 = inlined_call_operand.vmem [shape: f32[1,128], index: 4, kind: input, shape index: {}]
  %s5 = inlined_call_operand.hbm [shape: bf16[128,128], index: 5, kind: input, shape index: {}]
  %s6 = inlined_call_operand.vmem [shape: f32[1,128], index: 6, kind: input, shape index: {}]
  %s7 = inlined_call_operand.hbm [shape: f32[128,128], index: 7, kind: output, shape index: {}]
  %s8 = sld [smem:[#allocation0]]
  $region54: #{tpu_custom_call.1} parent=0
    _
  %s10 = ssub.s32 1, %s8
  %s11 = scalar_select 0, %s10, %s8
  $region1: #{tpu_custom_call.1} parent=0
    #allocation2 [shape = 'u8[32768]{0}', space=vmem, size = 0x8000, scoped, tag = 'input window, operand 0, single buffered']
    #allocation3 [shape = 's32[1]{0}', space=sflag, size = 0x4, scoped, tag = 'scoped memory for tpu_custom_call.1']
    #allocation4 [shape = 's32[1]{0}', space=sflag, size = 0x4, scoped, tag = 'scoped memory for tpu_custom_call.1']
    #allocation5 [shape = 'u8[32768]{0}', space=vmem, size = 0x8000, scoped, tag = 'input window, operand 1, single buffered']
    #allocation6 [shape = 's32[1]{0}', space=sflag, size = 0x4, scoped, tag = 'scoped memory for tpu_custom_call.1']
    #allocation7 [shape = 'u8[32768]{0}', space=vmem, size = 0x8000, scoped, tag = 'input window, operand 3, single buffered']
    #allocation8 [shape = 'u8[32768]{0}', space=vmem, size = 0x8000, scoped, tag = 'input window, operand 5, single buffered']
    #allocation9 [shape = 's32[1]{0}', space=sflag, size = 0x4, scoped, tag = 'scoped memory for tpu_custom_call.1']
    #allocation10 [shape = 'u8[65536]{0}', space=vmem, size = 0x10000, scoped, tag = 'output window, operand 0, single buffered']
    %12 = vsyncpa [#allocation3], 0
    %13 = vsyncpa [#allocation6], 0
    %14 = vsyncpa [#allocation9], 0
    %15 = vsyncpa [#allocation4], 0
    // Predicated region
    $region2: #{tpu_custom_call.1} parent=1 // pred_check
      _
    $region3: #{tpu_custom_call.1} parent=1 // pred_check_branch
      %17 = sbr.rel (0) target = $region5
    $region4: #{tpu_custom_call.1} parent=1 // pred_region
      %19 = vsyncadd [#allocation3], 0
      %s20 = sshll.u32 %s0, 4
      %s21 = int_to_ptr.hbm [resolvable:$true] %s20
      %s22 = sshll.u32 [#allocation2], 4
      %s23 = int_to_ptr.vmem [resolvable:$true] %s22
      %28 = dma.hbm_to_vmem [thread:$0]  %s21, 1024, %s23, [#allocation3], 64, 64, 4
    $region5: #{tpu_custom_call.1} parent=1 // pred_fallthru
      _
    // Predicated region
    $region6: #{tpu_custom_call.1} parent=1 // pred_check
      _
    $region7: #{tpu_custom_call.1} parent=1 // pred_check_branch
      %30 = sbr.rel (0) target = $region9
    $region8: #{tpu_custom_call.1} parent=1 // pred_region
      %32 = vsyncadd [#allocation6], 0
      %s33 = sshll.u32 %s1, 4
      %s34 = int_to_ptr.hbm [resolvable:$true] %s33
      %s35 = sshll.u32 [#allocation5], 4
      %s36 = int_to_ptr.vmem [resolvable:$true] %s35
      %41 = dma.hbm_to_vmem [thread:$0]  %s34, 1024, %s36, [#allocation6], 64, 64, 4
    $region9: #{tpu_custom_call.1} parent=1 // pred_fallthru
      _
    // Predicated region
    $region10: #{tpu_custom_call.1} parent=1 // pred_check
      _
    $region11: #{tpu_custom_call.1} parent=1 // pred_check_branch
      %43 = sbr.rel (0) target = $region13
    $region12: #{tpu_custom_call.1} parent=1 // pred_region
      _
    $region13: #{tpu_custom_call.1} parent=1 // pred_fallthru
      _
    // Predicated region
    $region14: #{tpu_custom_call.1} parent=1 // pred_check
      _
    $region15: #{tpu_custom_call.1} parent=1 // pred_check_branch
      %45 = sbr.rel (0) target = $region17
    $region16: #{tpu_custom_call.1} parent=1 // pred_region
      %47 = vsyncadd [#allocation6], 0
      %s48 = sshll.u32 %s3, 4
      %s49 = int_to_ptr.hbm [resolvable:$true] %s48
      %s50 = sshll.u32 [#allocation7], 4
      %s51 = int_to_ptr.vmem [resolvable:$true] %s50
      %56 = dma.hbm_to_vmem [thread:$0]  %s49, 1024, %s51, [#allocation6], 64, 64, 4
    $region17: #{tpu_custom_call.1} parent=1 // pred_fallthru
      _
    // Predicated region
    $region18: #{tpu_custom_call.1} parent=1 // pred_check
      _
    $region19: #{tpu_custom_call.1} parent=1 // pred_check_branch
      %58 = sbr.rel (0) target = $region21
    $region20: #{tpu_custom_call.1} parent=1 // pred_region
      _
    $region21: #{tpu_custom_call.1} parent=1 // pred_fallthru
      _
    // Predicated region
    $region22: #{tpu_custom_call.1} parent=1 // pred_check
      _
    $region23: #{tpu_custom_call.1} parent=1 // pred_check_branch
      %60 = sbr.rel (0) target = $region25
    $region24: #{tpu_custom_call.1} parent=1 // pred_region
      %62 = vsyncadd [#allocation9], 0
      %s63 = sshll.u32 %s5, 4
      %s64 = int_to_ptr.hbm [resolvable:$true] %s63
      %s65 = sshll.u32 [#allocation8], 4
      %s66 = int_to_ptr.vmem [resolvable:$true] %s65
      %71 = dma.hbm_to_vmem [thread:$0]  %s64, 1024, %s66, [#allocation9], 64, 64, 4
    $region25: #{tpu_custom_call.1} parent=1 // pred_fallthru
      _
    // Predicated region
    $region26: #{tpu_custom_call.1} parent=1 // pred_check
      _
    $region27: #{tpu_custom_call.1} parent=1 // pred_check_branch
      %73 = sbr.rel (0) target = $region29
    $region28: #{tpu_custom_call.1} parent=1 // pred_region
      _
    $region29: #{tpu_custom_call.1} parent=1 // pred_fallthru
      _
    // Predicated region
    $region30: #{tpu_custom_call.1} parent=1 // pred_check
      _
    $region31: #{tpu_custom_call.1} parent=1 // pred_check_branch
      %75 = sbr.rel (0) target = $region33
    $region32: #{tpu_custom_call.1} parent=1 // pred_region
      %77 = dma.done [#allocation3], 1024
    $region33: #{tpu_custom_call.1} parent=1 // pred_fallthru
      _
    // Predicated region
    $region34: #{tpu_custom_call.1} parent=1 // pred_check
      _
    $region35: #{tpu_custom_call.1} parent=1 // pred_check_branch
      %79 = sbr.rel (0) target = $region37
    $region36: #{tpu_custom_call.1} parent=1 // pred_region
      %81 = dma.done [#allocation6], 1024
    $region37: #{tpu_custom_call.1} parent=1 // pred_fallthru
      _
    // Predicated region
    $region38: #{tpu_custom_call.1} parent=1 // pred_check
      _
    $region39: #{tpu_custom_call.1} parent=1 // pred_check_branch
      %83 = sbr.rel (0) target = $region41
    $region40: #{tpu_custom_call.1} parent=1 // pred_region
      %85 = dma.done [#allocation6], 1024
    $region41: #{tpu_custom_call.1} parent=1 // pred_fallthru
      _
    // Predicated region
    $region42: #{tpu_custom_call.1} parent=1 // pred_check
      _
    $region43: #{tpu_custom_call.1} parent=1 // pred_check_branch
      %87 = sbr.rel (0) target = $region45
    $region44: #{tpu_custom_call.1} parent=1 // pred_region
      %89 = dma.done [#allocation9], 1024
    $region45: #{tpu_custom_call.1} parent=1 // pred_fallthru
      _
    %v90 = vld [vmem:[#allocation2] sm:$0xf]
    %v91 = vld [vmem:[#allocation2 + $0x4] sm:$0xf]
    %v92 = vld [vmem:[#allocation2 + $0x8] sm:$0xf]
    %v93 = vld [vmem:[#allocation2 + $0xc] sm:$0xf]
    %v94 = vld [vmem:[#allocation2 + $0x10] sm:$0xf]
    %v95 = vld [vmem:[#allocation2 + $0x14] sm:$0xf]
    %v96 = vld [vmem:[#allocation2 + $0x18] sm:$0xf]
    %v97 = vld [vmem:[#allocation2 + $0x1c] sm:$0xf]
    %v98 = vld [vmem:[#allocation2 + $0x20] sm:$0xf]
    %v99 = vld [vmem:[#allocation2 + $0x24] sm:$0xf]
    %v100 = vld [vmem:[#allocation2 + $0x28] sm:$0xf]
    %v101 = vld [vmem:[#allocation2 + $0x2c] sm:$0xf]
    %v102 = vld [vmem:[#allocation2 + $0x30] sm:$0xf]
    %v103 = vld [vmem:[#allocation2 + $0x34] sm:$0xf]
    %v104 = vld [vmem:[#allocation2 + $0x38] sm:$0xf]
    %v105 = vld [vmem:[#allocation2 + $0x3c] sm:$0xf]
    %v106 = vld [vmem:[#allocation5] sm:$0xf]
    %v107 = vld [vmem:[#allocation5 + $0x4] sm:$0xf]
    %v108 = vld [vmem:[#allocation5 + $0x8] sm:$0xf]
    %v109 = vld [vmem:[#allocation5 + $0xc] sm:$0xf]
    %v110 = vld [vmem:[#allocation5 + $0x10] sm:$0xf]
    %v111 = vld [vmem:[#allocation5 + $0x14] sm:$0xf]
    %v112 = vld [vmem:[#allocation5 + $0x18] sm:$0xf]
    %v113 = vld [vmem:[#allocation5 + $0x1c] sm:$0xf]
    %v114 = vld [vmem:[#allocation5 + $0x20] sm:$0xf]
    %v115 = vld [vmem:[#allocation5 + $0x24] sm:$0xf]
    %v116 = vld [vmem:[#allocation5 + $0x28] sm:$0xf]
    %v117 = vld [vmem:[#allocation5 + $0x2c] sm:$0xf]
    %v118 = vld [vmem:[#allocation5 + $0x30] sm:$0xf]
    %v119 = vld [vmem:[#allocation5 + $0x34] sm:$0xf]
    %v120 = vld [vmem:[#allocation5 + $0x38] sm:$0xf]
    %v121 = vld [vmem:[#allocation5 + $0x3c] sm:$0xf]
    %v122 = vld [vmem:[%s2] sm:$0x1]
    %v124 = vperm.slane %v122, 0
    %v142 = vunpack.c.l.b16 %v90
    %v143 = vunpack.c.l.b16 %v91
    %v144 = vunpack.c.l.b16 %v92
    %v145 = vunpack.c.l.b16 %v93
    %v146 = vunpack.c.l.b16 %v94
    %v147 = vunpack.c.l.b16 %v95
    %v148 = vunpack.c.l.b16 %v96
    %v149 = vunpack.c.l.b16 %v97
    %v150 = vunpack.c.l.b16 %v98
    %v151 = vunpack.c.l.b16 %v99
    %v152 = vunpack.c.l.b16 %v100
    %v153 = vunpack.c.l.b16 %v101
    %v154 = vunpack.c.l.b16 %v102
    %v155 = vunpack.c.l.b16 %v103
    %v156 = vunpack.c.l.b16 %v104
    %v157 = vunpack.c.l.b16 %v105
    %v158 = vpack.c.b16 %v143, %v142
    %v159 = vpack.c.b16 %v145, %v144
    %v160 = vpack.c.b16 %v147, %v146
    %v161 = vpack.c.b16 %v149, %v148
    %v162 = vpack.c.b16 %v151, %v150
    %v163 = vpack.c.b16 %v153, %v152
    %v164 = vpack.c.b16 %v155, %v154
    %v165 = vpack.c.b16 %v157, %v156
    %v190 = vunpack.c.l.b16 %v106
    %v191 = vunpack.c.l.b16 %v107
    %v192 = vunpack.c.l.b16 %v108
    %v193 = vunpack.c.l.b16 %v109
    %v194 = vunpack.c.l.b16 %v110
    %v195 = vunpack.c.l.b16 %v111
    %v196 = vunpack.c.l.b16 %v112
    %v197 = vunpack.c.l.b16 %v113
    %v198 = vunpack.c.l.b16 %v114
    %v199 = vunpack.c.l.b16 %v115
    %v200 = vunpack.c.l.b16 %v116
    %v201 = vunpack.c.l.b16 %v117
    %v202 = vunpack.c.l.b16 %v118
    %v203 = vunpack.c.l.b16 %v119
    %v204 = vunpack.c.l.b16 %v120
    %v205 = vunpack.c.l.b16 %v121
    %v206 = vpack.c.b16 %v191, %v190
    %v207 = vpack.c.b16 %v193, %v192
    %v208 = vpack.c.b16 %v195, %v194
    %v209 = vpack.c.b16 %v197, %v196
    %v210 = vpack.c.b16 %v199, %v198
    %v211 = vpack.c.b16 %v201, %v200
    %v212 = vpack.c.b16 %v203, %v202
    %v213 = vpack.c.b16 %v205, %v204
    %222 = vmatpush.bf16.msra.mxu0 %v213
    %223 = vmatpush.bf16.msra.mxu0 %v212
    %224 = vmatpush.bf16.msra.mxu0 %v211
    %225 = vmatpush.bf16.msra.mxu0 %v210
    %226 = vmatpush.bf16.msra.mxu0 %v209
    %227 = vmatpush.bf16.msra.mxu0 %v208
    %228 = vmatpush.bf16.msra.mxu0 %v207
    %229 = vmatpush.bf16.msra.mxu0 %v206
    %230 = vmatmul.bf16.gmra.mxu0 %v158
    %v231 = vpop.f32.mrf.mxu0
    %v232 = vadd.f32 %v124, %v231
    %v233 = vpop.f32.mrf.mxu0
    %v234 = vadd.f32 %v124, %v233
    %235 = vmatmul.bf16.gmra.mxu0 %v159
    %v236 = vpop.f32.mrf.mxu0
    %v237 = vadd.f32 %v124, %v236
    %v238 = vpop.f32.mrf.mxu0
    %v239 = vadd.f32 %v124, %v238
    %240 = vmatmul.bf16.gmra.mxu0 %v160
    %v241 = vpop.f32.mrf.mxu0
    %v242 = vadd.f32 %v124, %v241
    %v243 = vpop.f32.mrf.mxu0
    %v244 = vadd.f32 %v124, %v243
    %245 = vmatmul.bf16.gmra.mxu0 %v161
    %v246 = vpop.f32.mrf.mxu0
    %v247 = vadd.f32 %v124, %v246
    %v248 = vpop.f32.mrf.mxu0
    %v249 = vadd.f32 %v124, %v248
    %250 = vmatmul.bf16.gmra.mxu0 %v162
    %v251 = vpop.f32.mrf.mxu0
    %v252 = vadd.f32 %v124, %v251
    %v253 = vpop.f32.mrf.mxu0
    %v254 = vadd.f32 %v124, %v253
    %255 = vmatmul.bf16.gmra.mxu0 %v163
    %v256 = vpop.f32.mrf.mxu0
    %v257 = vadd.f32 %v124, %v256
    %v258 = vpop.f32.mrf.mxu0
    %v259 = vadd.f32 %v124, %v258
    %260 = vmatmul.bf16.gmra.mxu0 %v164
    %v261 = vpop.f32.mrf.mxu0
    %v262 = vadd.f32 %v124, %v261
    %v263 = vpop.f32.mrf.mxu0
    %v264 = vadd.f32 %v124, %v263
    %265 = vmatmul.bf16.gmra.mxu0 %v165
    %v266 = vpop.f32.mrf.mxu0
    %v267 = vadd.f32 %v124, %v266
    %v268 = vpop.f32.mrf.mxu0
    %v269 = vadd.f32 %v124, %v268
    %270 = vdwg.mxu0
    %v271 = vmax.f32 %v232, 0.0
    %v272 = vmax.f32 %v234, 0.0
    %v273 = vmax.f32 %v237, 0.0
    %v274 = vmax.f32 %v239, 0.0
    %v275 = vmax.f32 %v242, 0.0
    %v276 = vmax.f32 %v244, 0.0
    %v277 = vmax.f32 %v247, 0.0
    %v278 = vmax.f32 %v249, 0.0
    %v279 = vmax.f32 %v252, 0.0
    %v280 = vmax.f32 %v254, 0.0
    %v281 = vmax.f32 %v257, 0.0
    %v282 = vmax.f32 %v259, 0.0
    %v283 = vmax.f32 %v262, 0.0
    %v284 = vmax.f32 %v264, 0.0
    %v285 = vmax.f32 %v267, 0.0
    %v286 = vmax.f32 %v269, 0.0
    %v287 = vpack.c.bf16 %v272, %v271
    %v288 = vpack.c.bf16 %v274, %v273
    %v289 = vpack.c.bf16 %v276, %v275
    %v290 = vpack.c.bf16 %v278, %v277
    %v291 = vpack.c.bf16 %v280, %v279
    %v292 = vpack.c.bf16 %v282, %v281
    %v293 = vpack.c.bf16 %v284, %v283
    %v294 = vpack.c.bf16 %v286, %v285
    %v295 = vld [vmem:[#allocation7] sm:$0xf]
    %v296 = vld [vmem:[#allocation7 + $0x4] sm:$0xf]
    %v297 = vld [vmem:[#allocation7 + $0x8] sm:$0xf]
    %v298 = vld [vmem:[#allocation7 + $0xc] sm:$0xf]
    %v299 = vld [vmem:[#allocation7 + $0x10] sm:$0xf]
    %v300 = vld [vmem:[#allocation7 + $0x14] sm:$0xf]
    %v301 = vld [vmem:[#allocation7 + $0x18] sm:$0xf]
    %v302 = vld [vmem:[#allocation7 + $0x1c] sm:$0xf]
    %v303 = vld [vmem:[#allocation7 + $0x20] sm:$0xf]
    %v304 = vld [vmem:[#allocation7 + $0x24] sm:$0xf]
    %v305 = vld [vmem:[#allocation7 + $0x28] sm:$0xf]
    %v306 = vld [vmem:[#allocation7 + $0x2c] sm:$0xf]
    %v307 = vld [vmem:[#allocation7 + $0x30] sm:$0xf]
    %v308 = vld [vmem:[#allocation7 + $0x34] sm:$0xf]
    %v309 = vld [vmem:[#allocation7 + $0x38] sm:$0xf]
    %v310 = vld [vmem:[#allocation7 + $0x3c] sm:$0xf]
    %v311 = vld [vmem:[%s4] sm:$0x1]
    %v313 = vperm.slane %v311, 0
    %v331 = vunpack.c.l.b16 %v295
    %v332 = vunpack.c.l.b16 %v296
    %v333 = vunpack.c.l.b16 %v297
    %v334 = vunpack.c.l.b16 %v298
    %v335 = vunpack.c.l.b16 %v299
    %v336 = vunpack.c.l.b16 %v300
    %v337 = vunpack.c.l.b16 %v301
    %v338 = vunpack.c.l.b16 %v302
    %v339 = vunpack.c.l.b16 %v303
    %v340 = vunpack.c.l.b16 %v304
    %v341 = vunpack.c.l.b16 %v305
    %v342 = vunpack.c.l.b16 %v306
    %v343 = vunpack.c.l.b16 %v307
    %v344 = vunpack.c.l.b16 %v308
    %v345 = vunpack.c.l.b16 %v309
    %v346 = vunpack.c.l.b16 %v310
    %v347 = vpack.c.b16 %v332, %v331
    %v348 = vpack.c.b16 %v334, %v333
    %v349 = vpack.c.b16 %v336, %v335
    %v350 = vpack.c.b16 %v338, %v337
    %v351 = vpack.c.b16 %v340, %v339
    %v352 = vpack.c.b16 %v342, %v341
    %v353 = vpack.c.b16 %v344, %v343
    %v354 = vpack.c.b16 %v346, %v345
    %363 = vmatpush.bf16.msra.mxu0 %v354
    %364 = vmatpush.bf16.msra.mxu0 %v353
    %365 = vmatpush.bf16.msra.mxu0 %v352
    %366 = vmatpush.bf16.msra.mxu0 %v351
    %367 = vmatpush.bf16.msra.mxu0 %v350
    %368 = vmatpush.bf16.msra.mxu0 %v349
    %369 = vmatpush.bf16.msra.mxu0 %v348
    %370 = vmatpush.bf16.msra.mxu0 %v347
    %371 = vmatmul.bf16.gmra.mxu0 %v287
    %v372 = vpop.f32.mrf.mxu0
    %v373 = vadd.f32 %v313, %v372
    %v374 = vpop.f32.mrf.mxu0
    %v375 = vadd.f32 %v313, %v374
    %376 = vmatmul.bf16.gmra.mxu0 %v288
    %v377 = vpop.f32.mrf.mxu0
    %v378 = vadd.f32 %v313, %v377
    %v379 = vpop.f32.mrf.mxu0
    %v380 = vadd.f32 %v313, %v379
    %381 = vmatmul.bf16.gmra.mxu0 %v289
    %v382 = vpop.f32.mrf.mxu0
    %v383 = vadd.f32 %v313, %v382
    %v384 = vpop.f32.mrf.mxu0
    %v385 = vadd.f32 %v313, %v384
    %386 = vmatmul.bf16.gmra.mxu0 %v290
    %v387 = vpop.f32.mrf.mxu0
    %v388 = vadd.f32 %v313, %v387
    %v389 = vpop.f32.mrf.mxu0
    %v390 = vadd.f32 %v313, %v389
    %391 = vmatmul.bf16.gmra.mxu0 %v291
    %v392 = vpop.f32.mrf.mxu0
    %v393 = vadd.f32 %v313, %v392
    %v394 = vpop.f32.mrf.mxu0
    %v395 = vadd.f32 %v313, %v394
    %396 = vmatmul.bf16.gmra.mxu0 %v292
    %v397 = vpop.f32.mrf.mxu0
    %v398 = vadd.f32 %v313, %v397
    %v399 = vpop.f32.mrf.mxu0
    %v400 = vadd.f32 %v313, %v399
    %401 = vmatmul.bf16.gmra.mxu0 %v293
    %v402 = vpop.f32.mrf.mxu0
    %v403 = vadd.f32 %v313, %v402
    %v404 = vpop.f32.mrf.mxu0
    %v405 = vadd.f32 %v313, %v404
    %406 = vmatmul.bf16.gmra.mxu0 %v294
    %v407 = vpop.f32.mrf.mxu0
    %v408 = vadd.f32 %v313, %v407
    %v409 = vpop.f32.mrf.mxu0
    %v410 = vadd.f32 %v313, %v409
    %411 = vdwg.mxu0
    %v412 = vmax.f32 %v373, 0.0
    %v413 = vmax.f32 %v375, 0.0
    %v414 = vmax.f32 %v378, 0.0
    %v415 = vmax.f32 %v380, 0.0
    %v416 = vmax.f32 %v383, 0.0
    %v417 = vmax.f32 %v385, 0.0
    %v418 = vmax.f32 %v388, 0.0
    %v419 = vmax.f32 %v390, 0.0
    %v420 = vmax.f32 %v393, 0.0
    %v421 = vmax.f32 %v395, 0.0
    %v422 = vmax.f32 %v398, 0.0
    %v423 = vmax.f32 %v400, 0.0
    %v424 = vmax.f32 %v403, 0.0
    %v425 = vmax.f32 %v405, 0.0
    %v426 = vmax.f32 %v408, 0.0
    %v427 = vmax.f32 %v410, 0.0
    %v428 = vpack.c.bf16 %v413, %v412
    %v429 = vpack.c.bf16 %v415, %v414
    %v430 = vpack.c.bf16 %v417, %v416
    %v431 = vpack.c.bf16 %v419, %v418
    %v432 = vpack.c.bf16 %v421, %v420
    %v433 = vpack.c.bf16 %v423, %v422
    %v434 = vpack.c.bf16 %v425, %v424
    %v435 = vpack.c.bf16 %v427, %v426
    %v436 = vld [vmem:[#allocation8] sm:$0xf]
    %v437 = vld [vmem:[#allocation8 + $0x4] sm:$0xf]
    %v438 = vld [vmem:[#allocation8 + $0x8] sm:$0xf]
    %v439 = vld [vmem:[#allocation8 + $0xc] sm:$0xf]
    %v440 = vld [vmem:[#allocation8 + $0x10] sm:$0xf]
    %v441 = vld [vmem:[#allocation8 + $0x14] sm:$0xf]
    %v442 = vld [vmem:[#allocation8 + $0x18] sm:$0xf]
    %v443 = vld [vmem:[#allocation8 + $0x1c] sm:$0xf]
    %v444 = vld [vmem:[#allocation8 + $0x20] sm:$0xf]
    %v445 = vld [vmem:[#allocation8 + $0x24] sm:$0xf]
    %v446 = vld [vmem:[#allocation8 + $0x28] sm:$0xf]
    %v447 = vld [vmem:[#allocation8 + $0x2c] sm:$0xf]
    %v448 = vld [vmem:[#allocation8 + $0x30] sm:$0xf]
    %v449 = vld [vmem:[#allocation8 + $0x34] sm:$0xf]
    %v450 = vld [vmem:[#allocation8 + $0x38] sm:$0xf]
    %v451 = vld [vmem:[#allocation8 + $0x3c] sm:$0xf]
    %v452 = vld [vmem:[%s6] sm:$0x1]
    %v454 = vperm.slane %v452, 0
    %v472 = vunpack.c.l.b16 %v436
    %v473 = vunpack.c.l.b16 %v437
    %v474 = vunpack.c.l.b16 %v438
    %v475 = vunpack.c.l.b16 %v439
    %v476 = vunpack.c.l.b16 %v440
    %v477 = vunpack.c.l.b16 %v441
    %v478 = vunpack.c.l.b16 %v442
    %v479 = vunpack.c.l.b16 %v443
    %v480 = vunpack.c.l.b16 %v444
    %v481 = vunpack.c.l.b16 %v445
    %v482 = vunpack.c.l.b16 %v446
    %v483 = vunpack.c.l.b16 %v447
    %v484 = vunpack.c.l.b16 %v448
    %v485 = vunpack.c.l.b16 %v449
    %v486 = vunpack.c.l.b16 %v450
    %v487 = vunpack.c.l.b16 %v451
    %v488 = vpack.c.b16 %v473, %v472
    %v489 = vpack.c.b16 %v475, %v474
    %v490 = vpack.c.b16 %v477, %v476
    %v491 = vpack.c.b16 %v479, %v478
    %v492 = vpack.c.b16 %v481, %v480
    %v493 = vpack.c.b16 %v483, %v482
    %v494 = vpack.c.b16 %v485, %v484
    %v495 = vpack.c.b16 %v487, %v486
    %504 = vmatpush.bf16.msra.mxu0 %v495
    %505 = vmatpush.bf16.msra.mxu0 %v494
    %506 = vmatpush.bf16.msra.mxu0 %v493
    %507 = vmatpush.bf16.msra.mxu0 %v492
    %508 = vmatpush.bf16.msra.mxu0 %v491
    %509 = vmatpush.bf16.msra.mxu0 %v490
    %510 = vmatpush.bf16.msra.mxu0 %v489
    %511 = vmatpush.bf16.msra.mxu0 %v488
    %512 = vmatmul.bf16.gmra.mxu0 %v428
    %v513 = vpop.f32.mrf.mxu0
    %v514 = vadd.f32 %v454, %v513
    %v515 = vpop.f32.mrf.mxu0
    %v516 = vadd.f32 %v454, %v515
    %517 = vmatmul.bf16.gmra.mxu0 %v429
    %v518 = vpop.f32.mrf.mxu0
    %v519 = vadd.f32 %v454, %v518
    %v520 = vpop.f32.mrf.mxu0
    %v521 = vadd.f32 %v454, %v520
    %522 = vmatmul.bf16.gmra.mxu0 %v430
    %v523 = vpop.f32.mrf.mxu0
    %v524 = vadd.f32 %v454, %v523
    %v525 = vpop.f32.mrf.mxu0
    %v526 = vadd.f32 %v454, %v525
    %527 = vmatmul.bf16.gmra.mxu0 %v431
    %v528 = vpop.f32.mrf.mxu0
    %v529 = vadd.f32 %v454, %v528
    %v530 = vpop.f32.mrf.mxu0
    %v531 = vadd.f32 %v454, %v530
    %532 = vmatmul.bf16.gmra.mxu0 %v432
    %v533 = vpop.f32.mrf.mxu0
    %v534 = vadd.f32 %v454, %v533
    %v535 = vpop.f32.mrf.mxu0
    %v536 = vadd.f32 %v454, %v535
    %537 = vmatmul.bf16.gmra.mxu0 %v433
    %v538 = vpop.f32.mrf.mxu0
    %v539 = vadd.f32 %v454, %v538
    %v540 = vpop.f32.mrf.mxu0
    %v541 = vadd.f32 %v454, %v540
    %542 = vmatmul.bf16.gmra.mxu0 %v434
    %v543 = vpop.f32.mrf.mxu0
    %v544 = vadd.f32 %v454, %v543
    %v545 = vpop.f32.mrf.mxu0
    %v546 = vadd.f32 %v454, %v545
    %547 = vmatmul.bf16.gmra.mxu0 %v435
    %v548 = vpop.f32.mrf.mxu0
    %v549 = vadd.f32 %v454, %v548
    %v550 = vpop.f32.mrf.mxu0
    %v551 = vadd.f32 %v454, %v550
    %552 = vdwg.mxu0
    %553 = vst [vmem:[#allocation10] sm:$0xff] %v514
    %554 = vst [vmem:[#allocation10 + $0x8] sm:$0xff] %v516
    %555 = vst [vmem:[#allocation10 + $0x10] sm:$0xff] %v519
    %556 = vst [vmem:[#allocation10 + $0x18] sm:$0xff] %v521
    %557 = vst [vmem:[#allocation10 + $0x20] sm:$0xff] %v524
    %558 = vst [vmem:[#allocation10 + $0x28] sm:$0xff] %v526
    %559 = vst [vmem:[#allocation10 + $0x30] sm:$0xff] %v529
    %560 = vst [vmem:[#allocation10 + $0x38] sm:$0xff] %v531
    %561 = vst [vmem:[#allocation10 + $0x40] sm:$0xff] %v534
    %562 = vst [vmem:[#allocation10 + $0x48] sm:$0xff] %v536
    %563 = vst [vmem:[#allocation10 + $0x50] sm:$0xff] %v539
    %564 = vst [vmem:[#allocation10 + $0x58] sm:$0xff] %v541
    %565 = vst [vmem:[#allocation10 + $0x60] sm:$0xff] %v544
    %566 = vst [vmem:[#allocation10 + $0x68] sm:$0xff] %v546
    %567 = vst [vmem:[#allocation10 + $0x70] sm:$0xff] %v549
    %568 = vst [vmem:[#allocation10 + $0x78] sm:$0xff] %v551
    // Predicated region
    $region46: #{tpu_custom_call.1} parent=1 // pred_check
      _
    $region47: #{tpu_custom_call.1} parent=1 // pred_check_branch
      %570 = sbr.rel (0) target = $region49
    $region48: #{tpu_custom_call.1} parent=1 // pred_region
      %572 = vsyncadd [#allocation4], 0
      %s573 = sshll.u32 [#allocation10], 4
      %s574 = int_to_ptr.vmem [resolvable:$true] %s573
      %s575 = sshll.u32 %s7, 4
      %s576 = int_to_ptr.hbm [resolvable:$true] %s575
      %581 = dma.vmem_to_hbm [thread:$0]  %s574, 2048, %s576, [#allocation4], 128, 128, 8
    $region49: #{tpu_custom_call.1} parent=1 // pred_fallthru
      _
    // Predicated region
    $region50: #{tpu_custom_call.1} parent=1 // pred_check
      _
    $region51: #{tpu_custom_call.1} parent=1 // pred_check_branch
      %583 = sbr.rel (0) target = $region53
    $region52: #{tpu_custom_call.1} parent=1 // pred_region
      %585 = dma.done [#allocation4], 2048
    $region53: #{tpu_custom_call.1} parent=1 // pred_fallthru
      _
    %586 = vsyncpa [#allocation3], 1
    %587 = vsyncpa [#allocation6], 1
    %588 = vsyncpa [#allocation9], 1
    %589 = vsyncpa [#allocation4], 1

</llo_original>
